<compile_context>
chip_gen: v7x
topology: tpu7x:2x2x1
jax: 0.10.0
libtpu: 0.0.40
codegen_flags: <defaults>
</compile_context>

<pallas_src>
import jax
import jax.numpy as jnp
from jax.experimental import pallas as pl
from jax.experimental.pallas import tpu as pltpu


def _round_up(v: int, m: int) -> int:
    return (v + m - 1) // m * m


def _vmem_capacity_bytes() -> int:
    """Per-TensorCore VMEM capacity; conservative 64 MiB (v7x) if unknown."""
    try:
        return int(pltpu.get_tpu_info().vmem_capacity_bytes)
    except Exception:  # off-TPU tracing / older runtimes
        return 64 << 20


def _choose_row_tile(n_rows: int, row_cap: int) -> tuple[int, int]:
    """Pick (padded_rows, row_tile) for the streamed C row strips.

    Prefers a multiple-of-8 tile that divides n_rows exactly, so no wrapper
    jnp.pad pass over the bandwidth-dominant Coefficient is needed.  Only when
    no reasonably sized divisor exists (n % 8 != 0 or awkward factorisations)
    do we pad the rows of C.
    """
    if n_rows % 8 == 0:
        best, limit, t = 0, min(n_rows, row_cap), 8
        while t <= limit:
            if n_rows % t == 0:
                best = t
            t += 8
        if best >= min(128, n_rows, row_cap):
            return n_rows, best
    # Fallback: pad rows of C (costs one extra HBM pass over C; rare).
    if row_cap < 128:
        tm = max((row_cap // 8) * 8, 8)
        return _round_up(n_rows, tm), tm
    best_tm, best_nm = 128, _round_up(n_rows, 128)
    t = 136
    while t <= min(row_cap, 1024):
        nm = _round_up(n_rows, t)
        if nm < best_nm or (nm == best_nm and t > best_tm):
            best_tm, best_nm = t, nm
        t += 8
    return best_nm, best_tm


def _self_expression_kernel(x_ref, c_ref, o_ref):
    """One output tile = (tm, n) row strip of C times (n, td) slab of x.

    Full contraction per grid step (K axis collapsed), so no accumulator
    scratch and no init/finalize phases are needed.
    """
    o_ref[...] = jnp.dot(
        c_ref[...], x_ref[...], preferred_element_type=jnp.float32
    ).astype(o_ref.dtype)


def self_expression_forward(coeff: jax.Array, x: jax.Array) -> jax.Array:
    """y = coeff @ x  (coeff: (n, n), x: (n, d)); returns f32 (n, d)."""
    n, n2 = coeff.shape
    assert n == n2, "Coefficient must be square (n, n)"
    assert x.shape[0] == n, "x must have n rows"
    d = x.shape[1]

    # Tiny problems: launch overhead dominates; XLA's fused matmul wins.
    if n < 128:
        return jnp.dot(coeff, x, preferred_element_type=jnp.float32)

    c_item = jnp.dtype(coeff.dtype).itemsize
    x_item = jnp.dtype(x.dtype).itemsize

    # Generation-aware per-TC VMEM budget with headroom for Mosaic scratch.
    # With "parallel" row sharding each TC holds its own resident x copy, so
    # budget per TC, not per chip.
    cap = _vmem_capacity_bytes()
    usable = max(cap - (8 << 20), cap // 2)

    d_p = _round_up(d, 128)  # lane-dense output stores

    # --- x placement: fully resident (single-buffered) when it fits,
    #     otherwise stream (n, td) column tiles of x. ---
    x_budget = usable // 2
    if n * d_p * x_item <= x_budget:
        td, d_tiles = d_p, 1
        x_vmem = n * td * x_item                 # one buffer (constant block)
    else:
        td = (x_budget // (2 * n * x_item)) // 128 * 128
        if td < 128:
            # Even one 128-wide column strip of x overflows VMEM.
            # TODO(synk): K-tiled accumulator schedule for extreme n*d.
            return jnp.dot(coeff, x, preferred_element_type=jnp.float32)
        td = min(td, d_p)
        d_tiles = pl.cdiv(d_p, td)
        d_p = d_tiles * td
        x_vmem = 2 * n * td * x_item             # double-buffered

    # --- row strips of C: as big as remaining VMEM allows, but keep ~>=4
    #     strips of >= ~1 MiB so the C DMA overlaps the MXU and the ~0.35 us
    #     per-grid-step overhead stays amortized. ---
    rem = usable - x_vmem
    row_cap_vmem = rem // (2 * (n * c_item + td * 4))
    strip_rows_1mib = max(((1 << 20) // max(n * c_item, 1)) // 8 * 8, 8)
    overlap_cap = max(_round_up(pl.cdiv(n, 4), 8), strip_rows_1mib)
    row_cap = (min(row_cap_vmem, overlap_cap) // 8) * 8
    if row_cap < 8:
        return jnp.dot(coeff, x, preferred_element_type=jnp.float32)

    n_m, tm = _choose_row_tile(n, row_cap)

    # No wrapper pass over C in the common (tm | n) case; x is small.
    c_in = coeff if n_m == n else jnp.pad(coeff, ((0, n_m - n), (0, 0)))
    x_in = x if d_p == d else jnp.pad(x, ((0, 0), (0, d_p - d)))

    grid = (n_m // tm, d_tiles)  # K collapsed: full contraction per step

    if d_tiles == 1:
        # Constant block index -> fetched exactly once; single-buffer it.
        x_spec = pl.BlockSpec((n, td), lambda i, j: (0, 0),
                              pipeline_mode=pl.Buffered(1))
    else:
        # TODO(synk): this huge-x fallback re-streams x once per row strip; a
        # K-tiled accumulator schedule would avoid that.
        x_spec = pl.BlockSpec((n, td), lambda i, j: (0, j))
    c_spec = pl.BlockSpec((tm, n), lambda i, j: (i, 0))
    out_spec = pl.BlockSpec((tm, td), lambda i, j: (i, j))

    footprint = x_vmem + 2 * tm * n * c_item + 2 * tm * td * 4
    vmem_limit = int(min(cap, max(footprint + (8 << 20), 16 << 20)))

    cost = pl.CostEstimate(
        flops=2 * n * n * d,
        transcendentals=0,
        bytes_accessed=n * n * c_item + n * d * x_item + n * d * 4,
    )

    out_padded = pl.pallas_call(
        _self_expression_kernel,
        out_shape=jax.ShapeDtypeStruct((n_m, d_p), jnp.float32),
        grid_spec=pltpu.PrefetchScalarGridSpec(
            num_scalar_prefetch=0,
            grid=grid,
            in_specs=[x_spec, c_spec],
            out_specs=out_spec,
        ),
        compiler_params=pltpu.CompilerParams(
            dimension_semantics=("parallel", "parallel"),
            vmem_limit_bytes=vmem_limit,
        ),
        cost_estimate=cost,
    )(x_in, c_in)

    return out_padded[:n, :d]


if __name__ == "__main__":
    # n=384, d=96: not lane-aligned in d -> exercises x padding; n has a clean
    # multiple-of-8 divisor -> C is streamed unpadded in f32 (exact semantics).
    n, d = 384, 96

    # Deterministic parameter init, exactly nn.Parameter(1e-8 * ones(n, n)).
    coefficient = 1e-8 * jnp.ones((n, n), dtype=jnp.float32)

    key = jax.random.PRNGKey(0)
    x = jax.random.normal(key, (n, d), dtype=jnp.float32)

    y = self_expression_forward(coefficient, x)
    y = jax.block_until_ready(y)

    # Reference: plain f32 matmul (same semantics as torch.matmul).
    y_ref = coefficient @ x
    assert y.shape == (n, d)
    assert jnp.allclose(y, y_ref, atol=1e-6, rtol=1e-4), (
        float(jnp.max(jnp.abs(y - y_ref)))
    )

    print("KERNEL_OK")
</pallas_src>

<mosaic_0001>
module attributes {stable_mosaic.version = 11 : i64} {
  func.func @_self_expression_kernel(%arg0: i32, %arg1: i32, %arg2: memref<384x128xf32, #tpu.memory_space<vmem>>, %arg3: memref<384x384xf32, #tpu.memory_space<vmem>>, %arg4: memref<384x128xf32, #tpu.memory_space<vmem>>) attributes {dimension_semantics = [#tpu.dimension_semantics<parallel>, #tpu.dimension_semantics<parallel>], iteration_bounds = array<i64: 1, 1>, scalar_prefetch = 0 : i64, scratch_operands = 0 : i64, tpu.core_type = #tpu.core_type<tc>, window_params = [{pipeline_mode = #tpu.pipeline_mode<synchronous>, transform_indices = @transform_0, window_bounds = array<i64: 384, 128>}, {transform_indices = @transform_1, window_bounds = array<i64: 384, 384>}, {transform_indices = @transform_2, window_bounds = array<i64: 384, 128>}]} {
    %c0 = arith.constant 0 : index
    %c0_0 = arith.constant 0 : index
    %0 = vector.load %arg3[%c0, %c0_0] : memref<384x384xf32, #tpu.memory_space<vmem>>, vector<384x384xf32>
    %c0_1 = arith.constant 0 : index
    %c0_2 = arith.constant 0 : index
    %1 = vector.load %arg2[%c0_1, %c0_2] : memref<384x128xf32, #tpu.memory_space<vmem>>, vector<384x128xf32>
    %cst = arith.constant dense<0.000000e+00> : vector<384x128xf32>
    %2 = tpu.matmul %0, %1, %cst {dimension_numbers = #tpu.dot_dimension_numbers<[1], [0], [0], [1], [0, 0, 1, 1], [], []>} : vector<384x384xf32>, vector<384x128xf32>, vector<384x128xf32> -> vector<384x128xf32>
    %c0_3 = arith.constant 0 : index
    %c0_4 = arith.constant 0 : index
    %3 = vector.load %arg4[%c0_3, %c0_4] : memref<384x128xf32, #tpu.memory_space<vmem>>, vector<384x128xf32>
    tpu.vector_store %arg4[%c0_3, %c0_4], %2 {strides = array<i32>} : memref<384x128xf32, #tpu.memory_space<vmem>>, vector<384x128xf32>,
    return
  }
  func.func @transform_0(%arg0: i32, %arg1: i32) -> (i32, i32) {
    %c0_i32 = arith.constant 0 : i32
    %c0_i32_0 = arith.constant 0 : i32
    %c0_i32_1 = arith.constant 0 : i32
    return %c0_i32, %c0_i32_0 : i32, i32
  }
  func.func @transform_1(%arg0: i32, %arg1: i32) -> (i32, i32) {
    %c0_i32 = arith.constant 0 : i32
    %c0_i32_0 = arith.constant 0 : i32
    return %arg0, %c0_i32 : i32, i32
  }
  func.func @transform_2(%arg0: i32, %arg1: i32) -> (i32, i32) {
    %c0_i32 = arith.constant 0 : i32
    return %arg0, %arg1 : i32, i32
  }
}

</mosaic_0001>

<llo_original>
// kernel: tpu_custom_call.1
$region0: #{tpu_custom_call.1}
  #allocation0 [shape = 'u32[]', space=smem, size = 0x4, offset = 0x4, fixed_abs, tag = 'smem constant byte address 0x4 - core index']
  #allocation1 [shape = 'u32[144,128]{1,0:T(1,128)}', space=vmem, size = 0x12000, scoped, tag = 'internal scratch']
  %s0 = inlined_call_operand.hbm [shape: f32[384,128], index: 0, kind: input, shape index: {}]
  %s1 = inlined_call_operand.hbm [shape: f32[384,384], index: 1, kind: input, shape index: {}]
  %s2 = inlined_call_operand.hbm [shape: f32[384,128], index: 2, kind: output, shape index: {}]
  %s3 = sld [smem:[#allocation0]]
  $region26: #{tpu_custom_call.1} parent=0
    _
  %s5 = ssub.s32 1, %s3
  %s6 = scalar_select 0, %s5, %s3
  $region1: #{tpu_custom_call.1} parent=0
    #allocation2 [shape = 'u8[196608]{0}', space=vmem, size = 0x30000, scoped, tag = 'input window, operand 0, single buffered']
    #allocation3 [shape = 's32[1]{0}', space=sflag, size = 0x4, scoped, tag = 'scoped memory for tpu_custom_call.1']
    #allocation4 [shape = 's32[1]{0}', space=sflag, size = 0x4, scoped, tag = 'scoped memory for tpu_custom_call.1']
    #allocation5 [shape = 'u8[589824]{0}', space=vmem, size = 0x90000, scoped, tag = 'input window, operand 1, single buffered']
    #allocation6 [shape = 's32[1]{0}', space=sflag, size = 0x4, scoped, tag = 'scoped memory for tpu_custom_call.1']
    #allocation7 [shape = 'u8[196608]{0}', space=vmem, size = 0x30000, scoped, tag = 'output window, operand 0, single buffered']
    %7 = vsyncpa [#allocation3], 0
    %8 = vsyncpa [#allocation6], 0
    %9 = vsyncpa [#allocation4], 0
    // Predicated region
    $region2: #{tpu_custom_call.1} parent=1 // pred_check
      _
    $region3: #{tpu_custom_call.1} parent=1 // pred_check_branch
      %11 = sbr.rel (0) target = $region5
    $region4: #{tpu_custom_call.1} parent=1 // pred_region
      %s13 = ssub.s32 6144, 6144
      %14 = vsyncadd [#allocation3], %s13
      %s15 = sshll.u32 [#allocation2], 4
      %s16 = int_to_ptr.vmem [resolvable:$true] %s15
      %21 = dma.hbm_to_vmem [thread:$0]  %s0, 6144, %s16, [#allocation3], 128, 128, 8
    $region5: #{tpu_custom_call.1} parent=1 // pred_fallthru
      _
    // Predicated region
    $region6: #{tpu_custom_call.1} parent=1 // pred_check
      _
    $region7: #{tpu_custom_call.1} parent=1 // pred_check_branch
      %23 = sbr.rel (0) target = $region9
    $region8: #{tpu_custom_call.1} parent=1 // pred_region
      %s25 = ssub.s32 18432, 18432
      %26 = vsyncadd [#allocation6], %s25
      %s27 = sshll.u32 [#allocation5], 4
      %s28 = int_to_ptr.vmem [resolvable:$true] %s27
      %33 = dma.hbm_to_vmem [thread:$0]  %s1, 18432, %s28, [#allocation6], 384, 384, 24
    $region9: #{tpu_custom_call.1} parent=1 // pred_fallthru
      _
    // Predicated region
    $region10: #{tpu_custom_call.1} parent=1 // pred_check
      _
    $region11: #{tpu_custom_call.1} parent=1 // pred_check_branch
      %35 = sbr.rel (0) target = $region13
    $region12: #{tpu_custom_call.1} parent=1 // pred_region
      %36 = dma.done [#allocation3], 6144
    $region13: #{tpu_custom_call.1} parent=1 // pred_fallthru
      _
    // Predicated region
    $region14: #{tpu_custom_call.1} parent=1 // pred_check
      _
    $region15: #{tpu_custom_call.1} parent=1 // pred_check_branch
      %38 = sbr.rel (0) target = $region17
    $region16: #{tpu_custom_call.1} parent=1 // pred_region
      %39 = dma.done [#allocation6], 18432
    $region17: #{tpu_custom_call.1} parent=1 // pred_fallthru
      _
    %v40 = vld [vmem:[#allocation5] sm:$0xff]
    %v41 = vld [vmem:[#allocation5 + $0x8] sm:$0xff]
    %v42 = vld [vmem:[#allocation5 + $0x10] sm:$0xff]
    %v43 = vld [vmem:[#allocation5 + $0x18] sm:$0xff]
    %v44 = vld [vmem:[#allocation5 + $0x20] sm:$0xff]
    %v45 = vld [vmem:[#allocation5 + $0x28] sm:$0xff]
    %v46 = vld [vmem:[#allocation5 + $0x30] sm:$0xff]
    %v47 = vld [vmem:[#allocation5 + $0x38] sm:$0xff]
    %v48 = vld [vmem:[#allocation5 + $0x40] sm:$0xff]
    %v49 = vld [vmem:[#allocation5 + $0x48] sm:$0xff]
    %v50 = vld [vmem:[#allocation5 + $0x50] sm:$0xff]
    %v51 = vld [vmem:[#allocation5 + $0x58] sm:$0xff]
    %v52 = vld [vmem:[#allocation5 + $0x60] sm:$0xff]
    %v53 = vld [vmem:[#allocation5 + $0x68] sm:$0xff]
    %v54 = vld [vmem:[#allocation5 + $0x70] sm:$0xff]
    %v55 = vld [vmem:[#allocation5 + $0x78] sm:$0xff]
    %v56 = vld [vmem:[#allocation5 + $0x80] sm:$0xff]
    %v57 = vld [vmem:[#allocation5 + $0x88] sm:$0xff]
    %v58 = vld [vmem:[#allocation5 + $0x90] sm:$0xff]
    %v59 = vld [vmem:[#allocation5 + $0x98] sm:$0xff]
    %v60 = vld [vmem:[#allocation5 + $0xa0] sm:$0xff]
    %v61 = vld [vmem:[#allocation5 + $0xa8] sm:$0xff]
    %v62 = vld [vmem:[#allocation5 + $0xb0] sm:$0xff]
    %v63 = vld [vmem:[#allocation5 + $0xb8] sm:$0xff]
    %v64 = vld [vmem:[#allocation5 + $0xc0] sm:$0xff]
    %v65 = vld [vmem:[#allocation5 + $0xc8] sm:$0xff]
    %v66 = vld [vmem:[#allocation5 + $0xd0] sm:$0xff]
    %v67 = vld [vmem:[#allocation5 + $0xd8] sm:$0xff]
    %v68 = vld [vmem:[#allocation5 + $0xe0] sm:$0xff]
    %v69 = vld [vmem:[#allocation5 + $0xe8] sm:$0xff]
    %v70 = vld [vmem:[#allocation5 + $0xf0] sm:$0xff]
    %v71 = vld [vmem:[#allocation5 + $0xf8] sm:$0xff]
    %v72 = vld [vmem:[#allocation5 + $0x100] sm:$0xff]
    %v73 = vld [vmem:[#allocation5 + $0x108] sm:$0xff]
    %v74 = vld [vmem:[#allocation5 + $0x110] sm:$0xff]
    %v75 = vld [vmem:[#allocation5 + $0x118] sm:$0xff]
    %v76 = vld [vmem:[#allocation5 + $0x120] sm:$0xff]
    %v77 = vld [vmem:[#allocation5 + $0x128] sm:$0xff]
    %v78 = vld [vmem:[#allocation5 + $0x130] sm:$0xff]
    %v79 = vld [vmem:[#allocation5 + $0x138] sm:$0xff]
    %v80 = vld [vmem:[#allocation5 + $0x140] sm:$0xff]
    %v81 = vld [vmem:[#allocation5 + $0x148] sm:$0xff]
    %v82 = vld [vmem:[#allocation5 + $0x150] sm:$0xff]
    %v83 = vld [vmem:[#allocation5 + $0x158] sm:$0xff]
    %v84 = vld [vmem:[#allocation5 + $0x160] sm:$0xff]
    %v85 = vld [vmem:[#allocation5 + $0x168] sm:$0xff]
    %v86 = vld [vmem:[#allocation5 + $0x170] sm:$0xff]
    %v87 = vld [vmem:[#allocation5 + $0x178] sm:$0xff]
    %v88 = vld [vmem:[#allocation5 + $0x180] sm:$0xff]
    %v89 = vld [vmem:[#allocation5 + $0x188] sm:$0xff]
    %v90 = vld [vmem:[#allocation5 + $0x190] sm:$0xff]
    %v91 = vld [vmem:[#allocation5 + $0x198] sm:$0xff]
    %v92 = vld [vmem:[#allocation5 + $0x1a0] sm:$0xff]
    %v93 = vld [vmem:[#allocation5 + $0x1a8] sm:$0xff]
    %v94 = vld [vmem:[#allocation5 + $0x1b0] sm:$0xff]
    %v95 = vld [vmem:[#allocation5 + $0x1b8] sm:$0xff]
    %v96 = vld [vmem:[#allocation5 + $0x1c0] sm:$0xff]
    %v97 = vld [vmem:[#allocation5 + $0x1c8] sm:$0xff]
    %v98 = vld [vmem:[#allocation5 + $0x1d0] sm:$0xff]
    %v99 = vld [vmem:[#allocation5 + $0x1d8] sm:$0xff]
    %v100 = vld [vmem:[#allocation5 + $0x1e0] sm:$0xff]
    %v101 = vld [vmem:[#allocation5 + $0x1e8] sm:$0xff]
    %v102 = vld [vmem:[#allocation5 + $0x1f0] sm:$0xff]
    %v103 = vld [vmem:[#allocation5 + $0x1f8] sm:$0xff]
    %v104 = vld [vmem:[#allocation5 + $0x200] sm:$0xff]
    %v105 = vld [vmem:[#allocation5 + $0x208] sm:$0xff]
    %v106 = vld [vmem:[#allocation5 + $0x210] sm:$0xff]
    %v107 = vld [vmem:[#allocation5 + $0x218] sm:$0xff]
    %v108 = vld [vmem:[#allocation5 + $0x220] sm:$0xff]
    %v109 = vld [vmem:[#allocation5 + $0x228] sm:$0xff]
    %v110 = vld [vmem:[#allocation5 + $0x230] sm:$0xff]
    %v111 = vld [vmem:[#allocation5 + $0x238] sm:$0xff]
    %v112 = vld [vmem:[#allocation5 + $0x240] sm:$0xff]
    %v113 = vld [vmem:[#allocation5 + $0x248] sm:$0xff]
    %v114 = vld [vmem:[#allocation5 + $0x250] sm:$0xff]
    %v115 = vld [vmem:[#allocation5 + $0x258] sm:$0xff]
    %v116 = vld [vmem:[#allocation5 + $0x260] sm:$0xff]
    %v117 = vld [vmem:[#allocation5 + $0x268] sm:$0xff]
    %v118 = vld [vmem:[#allocation5 + $0x270] sm:$0xff]
    %v119 = vld [vmem:[#allocation5 + $0x278] sm:$0xff]
    %v120 = vld [vmem:[#allocation5 + $0x280] sm:$0xff]
    %v121 = vld [vmem:[#allocation5 + $0x288] sm:$0xff]
    %v122 = vld [vmem:[#allocation5 + $0x290] sm:$0xff]
    %v123 = vld [vmem:[#allocation5 + $0x298] sm:$0xff]
    %v124 = vld [vmem:[#allocation5 + $0x2a0] sm:$0xff]
    %v125 = vld [vmem:[#allocation5 + $0x2a8] sm:$0xff]
    %v126 = vld [vmem:[#allocation5 + $0x2b0] sm:$0xff]
    %v127 = vld [vmem:[#allocation5 + $0x2b8] sm:$0xff]
    %v128 = vld [vmem:[#allocation5 + $0x2c0] sm:$0xff]
    %v129 = vld [vmem:[#allocation5 + $0x2c8] sm:$0xff]
    %v130 = vld [vmem:[#allocation5 + $0x2d0] sm:$0xff]
    %v131 = vld [vmem:[#allocation5 + $0x2d8] sm:$0xff]
    %v132 = vld [vmem:[#allocation5 + $0x2e0] sm:$0xff]
    %v133 = vld [vmem:[#allocation5 + $0x2e8] sm:$0xff]
    %v134 = vld [vmem:[#allocation5 + $0x2f0] sm:$0xff]
    %v135 = vld [vmem:[#allocation5 + $0x2f8] sm:$0xff]
    %v136 = vld [vmem:[#allocation5 + $0x300] sm:$0xff]
    %v137 = vld [vmem:[#allocation5 + $0x308] sm:$0xff]
    %v138 = vld [vmem:[#allocation5 + $0x310] sm:$0xff]
    %v139 = vld [vmem:[#allocation5 + $0x318] sm:$0xff]
    %v140 = vld [vmem:[#allocation5 + $0x320] sm:$0xff]
    %v141 = vld [vmem:[#allocation5 + $0x328] sm:$0xff]
    %v142 = vld [vmem:[#allocation5 + $0x330] sm:$0xff]
    %v143 = vld [vmem:[#allocation5 + $0x338] sm:$0xff]
    %v144 = vld [vmem:[#allocation5 + $0x340] sm:$0xff]
    %v145 = vld [vmem:[#allocation5 + $0x348] sm:$0xff]
    %v146 = vld [vmem:[#allocation5 + $0x350] sm:$0xff]
    %v147 = vld [vmem:[#allocation5 + $0x358] sm:$0xff]
    %v148 = vld [vmem:[#allocation5 + $0x360] sm:$0xff]
    %v149 = vld [vmem:[#allocation5 + $0x368] sm:$0xff]
    %v150 = vld [vmem:[#allocation5 + $0x370] sm:$0xff]
    %v151 = vld [vmem:[#allocation5 + $0x378] sm:$0xff]
    %v152 = vld [vmem:[#allocation5 + $0x380] sm:$0xff]
    %v153 = vld [vmem:[#allocation5 + $0x388] sm:$0xff]
    %v154 = vld [vmem:[#allocation5 + $0x390] sm:$0xff]
    %v155 = vld [vmem:[#allocation5 + $0x398] sm:$0xff]
    %v156 = vld [vmem:[#allocation5 + $0x3a0] sm:$0xff]
    %v157 = vld [vmem:[#allocation5 + $0x3a8] sm:$0xff]
    %v158 = vld [vmem:[#allocation5 + $0x3b0] sm:$0xff]
    %v159 = vld [vmem:[#allocation5 + $0x3b8] sm:$0xff]
    %v160 = vld [vmem:[#allocation5 + $0x3c0] sm:$0xff]
    %v161 = vld [vmem:[#allocation5 + $0x3c8] sm:$0xff]
    %v162 = vld [vmem:[#allocation5 + $0x3d0] sm:$0xff]
    %v163 = vld [vmem:[#allocation5 + $0x3d8] sm:$0xff]
    %v164 = vld [vmem:[#allocation5 + $0x3e0] sm:$0xff]
    %v165 = vld [vmem:[#allocation5 + $0x3e8] sm:$0xff]
    %v166 = vld [vmem:[#allocation5 + $0x3f0] sm:$0xff]
    %v167 = vld [vmem:[#allocation5 + $0x3f8] sm:$0xff]
    %v168 = vld [vmem:[#allocation5 + $0x400] sm:$0xff]
    %v169 = vld [vmem:[#allocation5 + $0x408] sm:$0xff]
    %v170 = vld [vmem:[#allocation5 + $0x410] sm:$0xff]
    %v171 = vld [vmem:[#allocation5 + $0x418] sm:$0xff]
    %v172 = vld [vmem:[#allocation5 + $0x420] sm:$0xff]
    %v173 = vld [vmem:[#allocation5 + $0x428] sm:$0xff]
    %v174 = vld [vmem:[#allocation5 + $0x430] sm:$0xff]
    %v175 = vld [vmem:[#allocation5 + $0x438] sm:$0xff]
    %v176 = vld [vmem:[#allocation5 + $0x440] sm:$0xff]
    %v177 = vld [vmem:[#allocation5 + $0x448] sm:$0xff]
    %v178 = vld [vmem:[#allocation5 + $0x450] sm:$0xff]
    %v179 = vld [vmem:[#allocation5 + $0x458] sm:$0xff]
    %v180 = vld [vmem:[#allocation5 + $0x460] sm:$0xff]
    %v181 = vld [vmem:[#allocation5 + $0x468] sm:$0xff]
    %v182 = vld [vmem:[#allocation5 + $0x470] sm:$0xff]
    %v183 = vld [vmem:[#allocation5 + $0x478] sm:$0xff]
    %v184 = vld [vmem:[#allocation2] sm:$0xff]
    %v185 = vld [vmem:[#allocation2 + $0x8] sm:$0xff]
    %v186 = vld [vmem:[#allocation2 + $0x10] sm:$0xff]
    %v187 = vld [vmem:[#allocation2 + $0x18] sm:$0xff]
    %v188 = vld [vmem:[#allocation2 + $0x20] sm:$0xff]
    %v189 = vld [vmem:[#allocation2 + $0x28] sm:$0xff]
    %v190 = vld [vmem:[#allocation2 + $0x30] sm:$0xff]
    %v191 = vld [vmem:[#allocation2 + $0x38] sm:$0xff]
    %v192 = vld [vmem:[#allocation2 + $0x40] sm:$0xff]
    %v193 = vld [vmem:[#allocation2 + $0x48] sm:$0xff]
    %v194 = vld [vmem:[#allocation2 + $0x50] sm:$0xff]
    %v195 = vld [vmem:[#allocation2 + $0x58] sm:$0xff]
    %v196 = vld [vmem:[#allocation2 + $0x60] sm:$0xff]
    %v197 = vld [vmem:[#allocation2 + $0x68] sm:$0xff]
    %v198 = vld [vmem:[#allocation2 + $0x70] sm:$0xff]
    %v199 = vld [vmem:[#allocation2 + $0x78] sm:$0xff]
    %v200 = vld [vmem:[#allocation2 + $0x80] sm:$0xff]
    %v201 = vld [vmem:[#allocation2 + $0x88] sm:$0xff]
    %v202 = vld [vmem:[#allocation2 + $0x90] sm:$0xff]
    %v203 = vld [vmem:[#allocation2 + $0x98] sm:$0xff]
    %v204 = vld [vmem:[#allocation2 + $0xa0] sm:$0xff]
    %v205 = vld [vmem:[#allocation2 + $0xa8] sm:$0xff]
    %v206 = vld [vmem:[#allocation2 + $0xb0] sm:$0xff]
    %v207 = vld [vmem:[#allocation2 + $0xb8] sm:$0xff]
    %v208 = vld [vmem:[#allocation2 + $0xc0] sm:$0xff]
    %v209 = vld [vmem:[#allocation2 + $0xc8] sm:$0xff]
    %v210 = vld [vmem:[#allocation2 + $0xd0] sm:$0xff]
    %v211 = vld [vmem:[#allocation2 + $0xd8] sm:$0xff]
    %v212 = vld [vmem:[#allocation2 + $0xe0] sm:$0xff]
    %v213 = vld [vmem:[#allocation2 + $0xe8] sm:$0xff]
    %v214 = vld [vmem:[#allocation2 + $0xf0] sm:$0xff]
    %v215 = vld [vmem:[#allocation2 + $0xf8] sm:$0xff]
    %v216 = vld [vmem:[#allocation2 + $0x100] sm:$0xff]
    %v217 = vld [vmem:[#allocation2 + $0x108] sm:$0xff]
    %v218 = vld [vmem:[#allocation2 + $0x110] sm:$0xff]
    %v219 = vld [vmem:[#allocation2 + $0x118] sm:$0xff]
    %v220 = vld [vmem:[#allocation2 + $0x120] sm:$0xff]
    %v221 = vld [vmem:[#allocation2 + $0x128] sm:$0xff]
    %v222 = vld [vmem:[#allocation2 + $0x130] sm:$0xff]
    %v223 = vld [vmem:[#allocation2 + $0x138] sm:$0xff]
    %v224 = vld [vmem:[#allocation2 + $0x140] sm:$0xff]
    %v225 = vld [vmem:[#allocation2 + $0x148] sm:$0xff]
    %v226 = vld [vmem:[#allocation2 + $0x150] sm:$0xff]
    %v227 = vld [vmem:[#allocation2 + $0x158] sm:$0xff]
    %v228 = vld [vmem:[#allocation2 + $0x160] sm:$0xff]
    %v229 = vld [vmem:[#allocation2 + $0x168] sm:$0xff]
    %v230 = vld [vmem:[#allocation2 + $0x170] sm:$0xff]
    %v231 = vld [vmem:[#allocation2 + $0x178] sm:$0xff]
    %232 = vmatprep.subr.mxu0 0.0
    %233 = vmatpush1.msra.mxu0 %v184
    %234 = vmatprep.subr.mxu0 0.0
    %235 = vmatpush1.msra.mxu0 %v185
    %236 = vmatprep.subr.mxu0 0.0
    %237 = vmatpush1.msra.mxu0 %v186
    %238 = vmatprep.subr.mxu0 0.0
    %239 = vmatpush1.msra.mxu0 %v187
    %240 = vmatprep.subr.mxu0 0.0
    %241 = vmatpush1.msra.mxu0 %v188
    %242 = vmatprep.subr.mxu0 0.0
    %243 = vmatpush1.msra.mxu0 %v189
    %244 = vmatprep.subr.mxu0 0.0
    %245 = vmatpush1.msra.mxu0 %v190
    %246 = vmatprep.subr.mxu0 0.0
    %247 = vmatpush1.msra.mxu0 %v191
    %248 = vmatprep.subr.mxu0 0.0
    %249 = vmatpush1.msra.mxu0 %v192
    %250 = vmatprep.subr.mxu0 0.0
    %251 = vmatpush1.msra.mxu0 %v193
    %252 = vmatprep.subr.mxu0 0.0
    %253 = vmatpush1.msra.mxu0 %v194
    %254 = vmatprep.subr.mxu0 0.0
    %255 = vmatpush1.msra.mxu0 %v195
    %256 = vmatprep.subr.mxu0 0.0
    %257 = vmatpush1.msra.mxu0 %v196
    %258 = vmatprep.subr.mxu0 0.0
    %259 = vmatpush1.msra.mxu0 %v197
    %260 = vmatprep.subr.mxu0 0.0
    %261 = vmatpush1.msra.mxu0 %v198
    %262 = vmatprep.subr.mxu0 0.0
    %263 = vmatpush1.msra.mxu0 %v199
    %264 = vmatprep.subr.mxu0 0.0
    %265 = vmatpush1.msra.mxu0 %v200
    %266 = vmatprep.subr.mxu0 0.0
    %267 = vmatpush1.msra.mxu0 %v201
    %268 = vmatprep.subr.mxu0 0.0
    %269 = vmatpush1.msra.mxu0 %v202
    %270 = vmatprep.subr.mxu0 0.0
    %271 = vmatpush1.msra.mxu0 %v203
    %272 = vmatprep.subr.mxu0 0.0
    %273 = vmatpush1.msra.mxu0 %v204
    %274 = vmatprep.subr.mxu0 0.0
    %275 = vmatpush1.msra.mxu0 %v205
    %276 = vmatprep.subr.mxu0 0.0
    %277 = vmatpush1.msra.mxu0 %v206
    %278 = vmatprep.subr.mxu0 0.0
    %279 = vmatpush1.msra.mxu0 %v207
    %280 = vmatprep.subr.mxu0 0.0
    %281 = vmatpush1.msra.mxu0 %v208
    %282 = vmatprep.subr.mxu0 0.0
    %283 = vmatpush1.msra.mxu0 %v209
    %284 = vmatprep.subr.mxu0 0.0
    %285 = vmatpush1.msra.mxu0 %v210
    %286 = vmatprep.subr.mxu0 0.0
    %287 = vmatpush1.msra.mxu0 %v211
    %288 = vmatprep.subr.mxu0 0.0
    %289 = vmatpush1.msra.mxu0 %v212
    %290 = vmatprep.subr.mxu0 0.0
    %291 = vmatpush1.msra.mxu0 %v213
    %292 = vmatprep.subr.mxu0 0.0
    %293 = vmatpush1.msra.mxu0 %v214
    %294 = vmatprep.subr.mxu0 0.0
    %295 = vmatpush1.msra.mxu0 %v215
    %296 = vmatprep.mubr.f32.mxu0 %v41
    %297 = vmatmul.mubr.f32.gmra.mrb[0].mxu0 %v40
    %v298 = vpop.f32.mrb[0].mxu0
    %v299 = vadd.f32 0.0, %v298
    %v300 = vpop.f32.mrb[0].mxu0
    %301 = vmatprep.mubr.f32.mxu0 %v44
    %302 = vmatmul.mubr.f32.gmra.mrb[0].mxu0 %v43
    %v303 = vpop.f32.mrb[0].mxu0
    %v304 = vadd.f32 0.0, %v303
    %v305 = vpop.f32.mrb[0].mxu0
    %306 = vmatprep.mubr.f32.mxu0 %v47
    %307 = vmatmul.mubr.f32.gmra.mrb[0].mxu0 %v46
    %v308 = vpop.f32.mrb[0].mxu0
    %v309 = vadd.f32 0.0, %v308
    %v310 = vpop.f32.mrb[0].mxu0
    %311 = vmatprep.mubr.f32.mxu0 %v50
    %312 = vmatmul.mubr.f32.gmra.mrb[0].mxu0 %v49
    %v313 = vpop.f32.mrb[0].mxu0
    %v314 = vadd.f32 0.0, %v313
    %v315 = vpop.f32.mrb[0].mxu0
    %316 = vmatprep.mubr.f32.mxu0 %v53
    %317 = vmatmul.mubr.f32.gmra.mrb[0].mxu0 %v52
    %v318 = vpop.f32.mrb[0].mxu0
    %v319 = vadd.f32 0.0, %v318
    %v320 = vpop.f32.mrb[0].mxu0
    %321 = vmatprep.mubr.f32.mxu0 %v56
    %322 = vmatmul.mubr.f32.gmra.mrb[0].mxu0 %v55
    %v323 = vpop.f32.mrb[0].mxu0
    %v324 = vadd.f32 0.0, %v323
    %v325 = vpop.f32.mrb[0].mxu0
    %326 = vmatprep.mubr.f32.mxu0 %v59
    %327 = vmatmul.mubr.f32.gmra.mrb[0].mxu0 %v58
    %v328 = vpop.f32.mrb[0].mxu0
    %v329 = vadd.f32 0.0, %v328
    %v330 = vpop.f32.mrb[0].mxu0
    %331 = vmatprep.mubr.f32.mxu0 %v62
    %332 = vmatmul.mubr.f32.gmra.mrb[0].mxu0 %v61
    %v333 = vpop.f32.mrb[0].mxu0
    %v334 = vadd.f32 0.0, %v333
    %v335 = vpop.f32.mrb[0].mxu0
    %336 = vmatprep.mubr.f32.mxu0 %v65
    %337 = vmatmul.mubr.f32.gmra.mrb[0].mxu0 %v64
    %v338 = vpop.f32.mrb[0].mxu0
    %v339 = vadd.f32 0.0, %v338
    %v340 = vpop.f32.mrb[0].mxu0
    %341 = vmatprep.mubr.f32.mxu0 %v68
    %342 = vmatmul.mubr.f32.gmra.mrb[0].mxu0 %v67
    %v343 = vpop.f32.mrb[0].mxu0
    %v344 = vadd.f32 0.0, %v343
    %v345 = vpop.f32.mrb[0].mxu0
    %346 = vmatprep.mubr.f32.mxu0 %v71
    %347 = vmatmul.mubr.f32.gmra.mrb[0].mxu0 %v70
    %v348 = vpop.f32.mrb[0].mxu0
    %v349 = vadd.f32 0.0, %v348
    %v350 = vpop.f32.mrb[0].mxu0
    %351 = vmatprep.mubr.f32.mxu0 %v74
    %352 = vmatmul.mubr.f32.gmra.mrb[0].mxu0 %v73
    %v353 = vpop.f32.mrb[0].mxu0
    %v354 = vadd.f32 0.0, %v353
    %v355 = vpop.f32.mrb[0].mxu0
    %356 = vmatprep.mubr.f32.mxu0 %v77
    %357 = vmatmul.mubr.f32.gmra.mrb[0].mxu0 %v76
    %v358 = vpop.f32.mrb[0].mxu0
    %v359 = vadd.f32 0.0, %v358
    %v360 = vpop.f32.mrb[0].mxu0
    %361 = vmatprep.mubr.f32.mxu0 %v80
    %362 = vmatmul.mubr.f32.gmra.mrb[0].mxu0 %v79
    %v363 = vpop.f32.mrb[0].mxu0
    %v364 = vadd.f32 0.0, %v363
    %v365 = vpop.f32.mrb[0].mxu0
    %366 = vmatprep.mubr.f32.mxu0 %v83
    %367 = vmatmul.mubr.f32.gmra.mrb[0].mxu0 %v82
    %v368 = vpop.f32.mrb[0].mxu0
    %v369 = vadd.f32 0.0, %v368
    %v370 = vpop.f32.mrb[0].mxu0
    %371 = vmatprep.mubr.f32.mxu0 %v86
    %372 = vmatmul.mubr.f32.gmra.mrb[0].mxu0 %v85
    %v373 = vpop.f32.mrb[0].mxu0
    %v374 = vadd.f32 0.0, %v373
    %v375 = vpop.f32.mrb[0].mxu0
    %376 = vmatprep.mubr.f32.mxu0 %v89
    %377 = vmatmul.mubr.f32.gmra.mrb[0].mxu0 %v88
    %v378 = vpop.f32.mrb[0].mxu0
    %v379 = vadd.f32 0.0, %v378
    %v380 = vpop.f32.mrb[0].mxu0
    %381 = vmatprep.mubr.f32.mxu0 %v92
    %382 = vmatmul.mubr.f32.gmra.mrb[0].mxu0 %v91
    %v383 = vpop.f32.mrb[0].mxu0
    %v384 = vadd.f32 0.0, %v383
    %v385 = vpop.f32.mrb[0].mxu0
    %386 = vmatprep.mubr.f32.mxu0 %v95
    %387 = vmatmul.mubr.f32.gmra.mrb[0].mxu0 %v94
    %v388 = vpop.f32.mrb[0].mxu0
    %v389 = vadd.f32 0.0, %v388
    %v390 = vpop.f32.mrb[0].mxu0
    %391 = vmatprep.mubr.f32.mxu0 %v98
    %392 = vmatmul.mubr.f32.gmra.mrb[0].mxu0 %v97
    %v393 = vpop.f32.mrb[0].mxu0
    %v394 = vadd.f32 0.0, %v393
    %v395 = vpop.f32.mrb[0].mxu0
    %396 = vmatprep.mubr.f32.mxu0 %v101
    %397 = vmatmul.mubr.f32.gmra.mrb[0].mxu0 %v100
    %v398 = vpop.f32.mrb[0].mxu0
    %v399 = vadd.f32 0.0, %v398
    %v400 = vpop.f32.mrb[0].mxu0
    %401 = vmatprep.mubr.f32.mxu0 %v104
    %402 = vmatmul.mubr.f32.gmra.mrb[0].mxu0 %v103
    %v403 = vpop.f32.mrb[0].mxu0
    %v404 = vadd.f32 0.0, %v403
    %v405 = vpop.f32.mrb[0].mxu0
    %406 = vmatprep.mubr.f32.mxu0 %v107
    %407 = vmatmul.mubr.f32.gmra.mrb[0].mxu0 %v106
    %v408 = vpop.f32.mrb[0].mxu0
    %v409 = vadd.f32 0.0, %v408
    %v410 = vpop.f32.mrb[0].mxu0
    %411 = vmatprep.mubr.f32.mxu0 %v110
    %412 = vmatmul.mubr.f32.gmra.mrb[0].mxu0 %v109
    %v413 = vpop.f32.mrb[0].mxu0
    %v414 = vadd.f32 0.0, %v413
    %v415 = vpop.f32.mrb[0].mxu0
    %416 = vmatprep.mubr.f32.mxu0 %v113
    %417 = vmatmul.mubr.f32.gmra.mrb[0].mxu0 %v112
    %v418 = vpop.f32.mrb[0].mxu0
    %v419 = vadd.f32 0.0, %v418
    %v420 = vpop.f32.mrb[0].mxu0
    %421 = vmatprep.mubr.f32.mxu0 %v116
    %422 = vmatmul.mubr.f32.gmra.mrb[0].mxu0 %v115
    %v423 = vpop.f32.mrb[0].mxu0
    %v424 = vadd.f32 0.0, %v423
    %v425 = vpop.f32.mrb[0].mxu0
    %426 = vmatprep.mubr.f32.mxu0 %v119
    %427 = vmatmul.mubr.f32.gmra.mrb[0].mxu0 %v118
    %v428 = vpop.f32.mrb[0].mxu0
    %v429 = vadd.f32 0.0, %v428
    %v430 = vpop.f32.mrb[0].mxu0
    %431 = vmatprep.mubr.f32.mxu0 %v122
    %432 = vmatmul.mubr.f32.gmra.mrb[0].mxu0 %v121
    %v433 = vpop.f32.mrb[0].mxu0
    %v434 = vadd.f32 0.0, %v433
    %v435 = vpop.f32.mrb[0].mxu0
    %436 = vmatprep.mubr.f32.mxu0 %v125
    %437 = vmatmul.mubr.f32.gmra.mrb[0].mxu0 %v124
    %v438 = vpop.f32.mrb[0].mxu0
    %v439 = vadd.f32 0.0, %v438
    %v440 = vpop.f32.mrb[0].mxu0
    %441 = vmatprep.mubr.f32.mxu0 %v128
    %442 = vmatmul.mubr.f32.gmra.mrb[0].mxu0 %v127
    %v443 = vpop.f32.mrb[0].mxu0
    %v444 = vadd.f32 0.0, %v443
    %v445 = vpop.f32.mrb[0].mxu0
    %446 = vmatprep.mubr.f32.mxu0 %v131
    %447 = vmatmul.mubr.f32.gmra.mrb[0].mxu0 %v130
    %v448 = vpop.f32.mrb[0].mxu0
    %v449 = vadd.f32 0.0, %v448
    %v450 = vpop.f32.mrb[0].mxu0
    %451 = vmatprep.mubr.f32.mxu0 %v134
    %452 = vmatmul.mubr.f32.gmra.mrb[0].mxu0 %v133
    %v453 = vpop.f32.mrb[0].mxu0
    %v454 = vadd.f32 0.0, %v453
    %v455 = vpop.f32.mrb[0].mxu0
    %456 = vmatprep.mubr.f32.mxu0 %v137
    %457 = vmatmul.mubr.f32.gmra.mrb[0].mxu0 %v136
    %v458 = vpop.f32.mrb[0].mxu0
    %v459 = vadd.f32 0.0, %v458
    %v460 = vpop.f32.mrb[0].mxu0
    %461 = vmatprep.mubr.f32.mxu0 %v140
    %462 = vmatmul.mubr.f32.gmra.mrb[0].mxu0 %v139
    %v463 = vpop.f32.mrb[0].mxu0
    %v464 = vadd.f32 0.0, %v463
    %v465 = vpop.f32.mrb[0].mxu0
    %466 = vmatprep.mubr.f32.mxu0 %v143
    %467 = vmatmul.mubr.f32.gmra.mrb[0].mxu0 %v142
    %v468 = vpop.f32.mrb[0].mxu0
    %v469 = vadd.f32 0.0, %v468
    %v470 = vpop.f32.mrb[0].mxu0
    %471 = vmatprep.mubr.f32.mxu0 %v146
    %472 = vmatmul.mubr.f32.gmra.mrb[0].mxu0 %v145
    %v473 = vpop.f32.mrb[0].mxu0
    %v474 = vadd.f32 0.0, %v473
    %v475 = vpop.f32.mrb[0].mxu0
    %476 = vmatprep.mubr.f32.mxu0 %v149
    %477 = vmatmul.mubr.f32.gmra.mrb[0].mxu0 %v148
    %v478 = vpop.f32.mrb[0].mxu0
    %v479 = vadd.f32 0.0, %v478
    %v480 = vpop.f32.mrb[0].mxu0
    %481 = vmatprep.mubr.f32.mxu0 %v152
    %482 = vmatmul.mubr.f32.gmra.mrb[0].mxu0 %v151
    %v483 = vpop.f32.mrb[0].mxu0
    %v484 = vadd.f32 0.0, %v483
    %v485 = vpop.f32.mrb[0].mxu0
    %486 = vmatprep.mubr.f32.mxu0 %v155
    %487 = vmatmul.mubr.f32.gmra.mrb[0].mxu0 %v154
    %v488 = vpop.f32.mrb[0].mxu0
    %v489 = vadd.f32 0.0, %v488
    %v490 = vpop.f32.mrb[0].mxu0
    %491 = vmatprep.mubr.f32.mxu0 %v158
    %492 = vmatmul.mubr.f32.gmra.mrb[0].mxu0 %v157
    %v493 = vpop.f32.mrb[0].mxu0
    %v494 = vadd.f32 0.0, %v493
    %v495 = vpop.f32.mrb[0].mxu0
    %496 = vmatprep.mubr.f32.mxu0 %v161
    %497 = vmatmul.mubr.f32.gmra.mrb[0].mxu0 %v160
    %v498 = vpop.f32.mrb[0].mxu0
    %v499 = vadd.f32 0.0, %v498
    %v500 = vpop.f32.mrb[0].mxu0
    %501 = vmatprep.mubr.f32.mxu0 %v164
    %502 = vmatmul.mubr.f32.gmra.mrb[0].mxu0 %v163
    %v503 = vpop.f32.mrb[0].mxu0
    %v504 = vadd.f32 0.0, %v503
    %v505 = vpop.f32.mrb[0].mxu0
    %506 = vmatprep.mubr.f32.mxu0 %v167
    %507 = vmatmul.mubr.f32.gmra.mrb[0].mxu0 %v166
    %v508 = vpop.f32.mrb[0].mxu0
    %v509 = vadd.f32 0.0, %v508
    %v510 = vpop.f32.mrb[0].mxu0
    %511 = vmatprep.mubr.f32.mxu0 %v170
    %512 = vmatmul.mubr.f32.gmra.mrb[0].mxu0 %v169
    %v513 = vpop.f32.mrb[0].mxu0
    %v514 = vadd.f32 0.0, %v513
    %v515 = vpop.f32.mrb[0].mxu0
    %516 = vmatprep.mubr.f32.mxu0 %v173
    %517 = vmatmul.mubr.f32.gmra.mrb[0].mxu0 %v172
    %v518 = vpop.f32.mrb[0].mxu0
    %v519 = vadd.f32 0.0, %v518
    %v520 = vpop.f32.mrb[0].mxu0
    %521 = vmatprep.mubr.f32.mxu0 %v176
    %522 = vmatmul.mubr.f32.gmra.mrb[0].mxu0 %v175
    %v523 = vpop.f32.mrb[0].mxu0
    %v524 = vadd.f32 0.0, %v523
    %v525 = vpop.f32.mrb[0].mxu0
    %526 = vmatprep.mubr.f32.mxu0 %v179
    %527 = vmatmul.mubr.f32.gmra.mrb[0].mxu0 %v178
    %v528 = vpop.f32.mrb[0].mxu0
    %v529 = vadd.f32 0.0, %v528
    %v530 = vpop.f32.mrb[0].mxu0
    %531 = vmatprep.mubr.f32.mxu0 %v182
    %532 = vmatmul.mubr.f32.gmra.mrb[0].mxu0 %v181
    %v533 = vpop.f32.mrb[0].mxu0
    %v534 = vadd.f32 0.0, %v533
    %v535 = vpop.f32.mrb[0].mxu0
    %536 = vdwg.mxu0
    %537 = vmatprep.subr.mxu0 0.0
    %538 = vmatpush1.msra.mxu0 %v216
    %539 = vmatprep.subr.mxu0 0.0
    %540 = vmatpush1.msra.mxu0 %v217
    %541 = vmatprep.subr.mxu0 0.0
    %542 = vmatpush1.msra.mxu0 %v218
    %543 = vmatprep.subr.mxu0 0.0
    %544 = vmatpush1.msra.mxu0 %v219
    %545 = vmatprep.subr.mxu0 0.0
    %546 = vmatpush1.msra.mxu0 %v220
    %547 = vmatprep.subr.mxu0 0.0
    %548 = vmatpush1.msra.mxu0 %v221
    %549 = vmatprep.subr.mxu0 0.0
    %550 = vmatpush1.msra.mxu0 %v222
    %551 = vmatprep.subr.mxu0 0.0
    %552 = vmatpush1.msra.mxu0 %v223
    %553 = vmatprep.subr.mxu0 0.0
    %554 = vmatpush1.msra.mxu0 %v224
    %555 = vmatprep.subr.mxu0 0.0
    %556 = vmatpush1.msra.mxu0 %v225
    %557 = vmatprep.subr.mxu0 0.0
    %558 = vmatpush1.msra.mxu0 %v226
    %559 = vmatprep.subr.mxu0 0.0
    %560 = vmatpush1.msra.mxu0 %v227
    %561 = vmatprep.subr.mxu0 0.0
    %562 = vmatpush1.msra.mxu0 %v228
    %563 = vmatprep.subr.mxu0 0.0
    %564 = vmatpush1.msra.mxu0 %v229
    %565 = vmatprep.subr.mxu0 0.0
    %566 = vmatpush1.msra.mxu0 %v230
    %567 = vmatprep.subr.mxu0 0.0
    %568 = vmatpush1.msra.mxu0 %v231
    %569 = vmatprep.subr.mxu0 0.0
    %570 = vmatpush1.msra.mxu0 0.0
    %571 = vmatprep.subr.mxu0 0.0
    %572 = vmatpush1.msra.mxu0 0.0
    %573 = vmatprep.subr.mxu0 0.0
    %574 = vmatpush1.msra.mxu0 0.0
    %575 = vmatprep.subr.mxu0 0.0
    %576 = vmatpush1.msra.mxu0 0.0
    %577 = vmatprep.subr.mxu0 0.0
    %578 = vmatpush1.msra.mxu0 0.0
    %579 = vmatprep.subr.mxu0 0.0
    %580 = vmatpush1.msra.mxu0 0.0
    %581 = vmatprep.subr.mxu0 0.0
    %582 = vmatpush1.msra.mxu0 0.0
    %583 = vmatprep.subr.mxu0 0.0
    %584 = vmatpush1.msra.mxu0 0.0
    %585 = vmatprep.subr.mxu0 0.0
    %586 = vmatpush1.msra.mxu0 0.0
    %587 = vmatprep.subr.mxu0 0.0
    %588 = vmatpush1.msra.mxu0 0.0
    %589 = vmatprep.subr.mxu0 0.0
    %590 = vmatpush1.msra.mxu0 0.0
    %591 = vmatprep.subr.mxu0 0.0
    %592 = vmatpush1.msra.mxu0 0.0
    %593 = vmatprep.subr.mxu0 0.0
    %594 = vmatpush1.msra.mxu0 0.0
    %595 = vmatprep.subr.mxu0 0.0
    %596 = vmatpush1.msra.mxu0 0.0
    %597 = vmatprep.subr.mxu0 0.0
    %598 = vmatpush1.msra.mxu0 0.0
    %599 = vmatprep.subr.mxu0 0.0
    %600 = vmatpush1.msra.mxu0 0.0
    %601 = vmatprep.mubr.f32.mxu0 0.0
    %602 = vmatmul.mubr.f32.gmra.mrb[0].mxu0 %v42
    %v603 = vpop.f32.mrb[0].mxu0
    %v604 = vadd.f32 %v299, %v603
    %v605 = vpop.f32.mrb[0].mxu0
    %606 = vmatprep.mubr.f32.mxu0 0.0
    %607 = vmatmul.mubr.f32.gmra.mrb[0].mxu0 %v45
    %v608 = vpop.f32.mrb[0].mxu0
    %v609 = vadd.f32 %v304, %v608
    %v610 = vpop.f32.mrb[0].mxu0
    %611 = vmatprep.mubr.f32.mxu0 0.0
    %612 = vmatmul.mubr.f32.gmra.mrb[0].mxu0 %v48
    %v613 = vpop.f32.mrb[0].mxu0
    %v614 = vadd.f32 %v309, %v613
    %v615 = vpop.f32.mrb[0].mxu0
    %616 = vmatprep.mubr.f32.mxu0 0.0
    %617 = vmatmul.mubr.f32.gmra.mrb[0].mxu0 %v51
    %v618 = vpop.f32.mrb[0].mxu0
    %v619 = vadd.f32 %v314, %v618
    %v620 = vpop.f32.mrb[0].mxu0
    %621 = vmatprep.mubr.f32.mxu0 0.0
    %622 = vmatmul.mubr.f32.gmra.mrb[0].mxu0 %v54
    %v623 = vpop.f32.mrb[0].mxu0
    %v624 = vadd.f32 %v319, %v623
    %v625 = vpop.f32.mrb[0].mxu0
    %626 = vmatprep.mubr.f32.mxu0 0.0
    %627 = vmatmul.mubr.f32.gmra.mrb[0].mxu0 %v57
    %v628 = vpop.f32.mrb[0].mxu0
    %v629 = vadd.f32 %v324, %v628
    %v630 = vpop.f32.mrb[0].mxu0
    %631 = vmatprep.mubr.f32.mxu0 0.0
    %632 = vmatmul.mubr.f32.gmra.mrb[0].mxu0 %v60
    %v633 = vpop.f32.mrb[0].mxu0
    %v634 = vadd.f32 %v329, %v633
    %v635 = vpop.f32.mrb[0].mxu0
    %636 = vmatprep.mubr.f32.mxu0 0.0
    %637 = vmatmul.mubr.f32.gmra.mrb[0].mxu0 %v63
    %v638 = vpop.f32.mrb[0].mxu0
    %v639 = vadd.f32 %v334, %v638
    %v640 = vpop.f32.mrb[0].mxu0
    %641 = vmatprep.mubr.f32.mxu0 0.0
    %642 = vmatmul.mubr.f32.gmra.mrb[0].mxu0 %v66
    %v643 = vpop.f32.mrb[0].mxu0
    %v644 = vadd.f32 %v339, %v643
    %v645 = vpop.f32.mrb[0].mxu0
    %646 = vmatprep.mubr.f32.mxu0 0.0
    %647 = vmatmul.mubr.f32.gmra.mrb[0].mxu0 %v69
    %v648 = vpop.f32.mrb[0].mxu0
    %v649 = vadd.f32 %v344, %v648
    %v650 = vpop.f32.mrb[0].mxu0
    %651 = vmatprep.mubr.f32.mxu0 0.0
    %652 = vmatmul.mubr.f32.gmra.mrb[0].mxu0 %v72
    %v653 = vpop.f32.mrb[0].mxu0
    %v654 = vadd.f32 %v349, %v653
    %v655 = vpop.f32.mrb[0].mxu0
    %656 = vmatprep.mubr.f32.mxu0 0.0
    %657 = vmatmul.mubr.f32.gmra.mrb[0].mxu0 %v75
    %v658 = vpop.f32.mrb[0].mxu0
    %v659 = vadd.f32 %v354, %v658
    %v660 = vpop.f32.mrb[0].mxu0
    %661 = vmatprep.mubr.f32.mxu0 0.0
    %662 = vmatmul.mubr.f32.gmra.mrb[0].mxu0 %v78
    %v663 = vpop.f32.mrb[0].mxu0
    %v664 = vadd.f32 %v359, %v663
    %v665 = vpop.f32.mrb[0].mxu0
    %666 = vmatprep.mubr.f32.mxu0 0.0
    %667 = vmatmul.mubr.f32.gmra.mrb[0].mxu0 %v81
    %v668 = vpop.f32.mrb[0].mxu0
    %v669 = vadd.f32 %v364, %v668
    %v670 = vpop.f32.mrb[0].mxu0
    %671 = vmatprep.mubr.f32.mxu0 0.0
    %672 = vmatmul.mubr.f32.gmra.mrb[0].mxu0 %v84
    %v673 = vpop.f32.mrb[0].mxu0
    %v674 = vadd.f32 %v369, %v673
    %v675 = vpop.f32.mrb[0].mxu0
    %676 = vmatprep.mubr.f32.mxu0 0.0
    %677 = vmatmul.mubr.f32.gmra.mrb[0].mxu0 %v87
    %v678 = vpop.f32.mrb[0].mxu0
    %v679 = vadd.f32 %v374, %v678
    %v680 = vpop.f32.mrb[0].mxu0
    %681 = vmatprep.mubr.f32.mxu0 0.0
    %682 = vmatmul.mubr.f32.gmra.mrb[0].mxu0 %v90
    %v683 = vpop.f32.mrb[0].mxu0
    %v684 = vadd.f32 %v379, %v683
    %v685 = vpop.f32.mrb[0].mxu0
    %686 = vmatprep.mubr.f32.mxu0 0.0
    %687 = vmatmul.mubr.f32.gmra.mrb[0].mxu0 %v93
    %v688 = vpop.f32.mrb[0].mxu0
    %v689 = vadd.f32 %v384, %v688
    %v690 = vpop.f32.mrb[0].mxu0
    %691 = vmatprep.mubr.f32.mxu0 0.0
    %692 = vmatmul.mubr.f32.gmra.mrb[0].mxu0 %v96
    %v693 = vpop.f32.mrb[0].mxu0
    %v694 = vadd.f32 %v389, %v693
    %v695 = vpop.f32.mrb[0].mxu0
    %696 = vmatprep.mubr.f32.mxu0 0.0
    %697 = vmatmul.mubr.f32.gmra.mrb[0].mxu0 %v99
    %v698 = vpop.f32.mrb[0].mxu0
    %v699 = vadd.f32 %v394, %v698
    %v700 = vpop.f32.mrb[0].mxu0
    %701 = vmatprep.mubr.f32.mxu0 0.0
    %702 = vmatmul.mubr.f32.gmra.mrb[0].mxu0 %v102
    %v703 = vpop.f32.mrb[0].mxu0
    %v704 = vadd.f32 %v399, %v703
    %v705 = vpop.f32.mrb[0].mxu0
    %706 = vmatprep.mubr.f32.mxu0 0.0
    %707 = vmatmul.mubr.f32.gmra.mrb[0].mxu0 %v105
    %v708 = vpop.f32.mrb[0].mxu0
    %v709 = vadd.f32 %v404, %v708
    %v710 = vpop.f32.mrb[0].mxu0
    %711 = vmatprep.mubr.f32.mxu0 0.0
    %712 = vmatmul.mubr.f32.gmra.mrb[0].mxu0 %v108
    %v713 = vpop.f32.mrb[0].mxu0
    %v714 = vadd.f32 %v409, %v713
    %v715 = vpop.f32.mrb[0].mxu0
    %716 = vmatprep.mubr.f32.mxu0 0.0
    %717 = vmatmul.mubr.f32.gmra.mrb[0].mxu0 %v111
    %v718 = vpop.f32.mrb[0].mxu0
    %v719 = vadd.f32 %v414, %v718
    %v720 = vpop.f32.mrb[0].mxu0
    %721 = vmatprep.mubr.f32.mxu0 0.0
    %722 = vmatmul.mubr.f32.gmra.mrb[0].mxu0 %v114
    %v723 = vpop.f32.mrb[0].mxu0
    %v724 = vadd.f32 %v419, %v723
    %v725 = vpop.f32.mrb[0].mxu0
    %726 = vmatprep.mubr.f32.mxu0 0.0
    %727 = vmatmul.mubr.f32.gmra.mrb[0].mxu0 %v117
    %v728 = vpop.f32.mrb[0].mxu0
    %v729 = vadd.f32 %v424, %v728
    %v730 = vpop.f32.mrb[0].mxu0
    %731 = vmatprep.mubr.f32.mxu0 0.0
    %732 = vmatmul.mubr.f32.gmra.mrb[0].mxu0 %v120
    %v733 = vpop.f32.mrb[0].mxu0
    %v734 = vadd.f32 %v429, %v733
    %v735 = vpop.f32.mrb[0].mxu0
    %736 = vmatprep.mubr.f32.mxu0 0.0
    %737 = vmatmul.mubr.f32.gmra.mrb[0].mxu0 %v123
    %v738 = vpop.f32.mrb[0].mxu0
    %v739 = vadd.f32 %v434, %v738
    %v740 = vpop.f32.mrb[0].mxu0
    %741 = vmatprep.mubr.f32.mxu0 0.0
    %742 = vmatmul.mubr.f32.gmra.mrb[0].mxu0 %v126
    %v743 = vpop.f32.mrb[0].mxu0
    %v744 = vadd.f32 %v439, %v743
    %v745 = vpop.f32.mrb[0].mxu0
    %746 = vmatprep.mubr.f32.mxu0 0.0
    %747 = vmatmul.mubr.f32.gmra.mrb[0].mxu0 %v129
    %v748 = vpop.f32.mrb[0].mxu0
    %v749 = vadd.f32 %v444, %v748
    %v750 = vpop.f32.mrb[0].mxu0
    %751 = vmatprep.mubr.f32.mxu0 0.0
    %752 = vmatmul.mubr.f32.gmra.mrb[0].mxu0 %v132
    %v753 = vpop.f32.mrb[0].mxu0
    %v754 = vadd.f32 %v449, %v753
    %v755 = vpop.f32.mrb[0].mxu0
    %756 = vmatprep.mubr.f32.mxu0 0.0
    %757 = vmatmul.mubr.f32.gmra.mrb[0].mxu0 %v135
    %v758 = vpop.f32.mrb[0].mxu0
    %v759 = vadd.f32 %v454, %v758
    %v760 = vpop.f32.mrb[0].mxu0
    %761 = vmatprep.mubr.f32.mxu0 0.0
    %762 = vmatmul.mubr.f32.gmra.mrb[0].mxu0 %v138
    %v763 = vpop.f32.mrb[0].mxu0
    %v764 = vadd.f32 %v459, %v763
    %v765 = vpop.f32.mrb[0].mxu0
    %766 = vmatprep.mubr.f32.mxu0 0.0
    %767 = vmatmul.mubr.f32.gmra.mrb[0].mxu0 %v141
    %v768 = vpop.f32.mrb[0].mxu0
    %v769 = vadd.f32 %v464, %v768
    %v770 = vpop.f32.mrb[0].mxu0
    %771 = vmatprep.mubr.f32.mxu0 0.0
    %772 = vmatmul.mubr.f32.gmra.mrb[0].mxu0 %v144
    %v773 = vpop.f32.mrb[0].mxu0
    %v774 = vadd.f32 %v469, %v773
    %v775 = vpop.f32.mrb[0].mxu0
    %776 = vmatprep.mubr.f32.mxu0 0.0
    %777 = vmatmul.mubr.f32.gmra.mrb[0].mxu0 %v147
    %v778 = vpop.f32.mrb[0].mxu0
    %v779 = vadd.f32 %v474, %v778
    %v780 = vpop.f32.mrb[0].mxu0
    %781 = vmatprep.mubr.f32.mxu0 0.0
    %782 = vmatmul.mubr.f32.gmra.mrb[0].mxu0 %v150
    %v783 = vpop.f32.mrb[0].mxu0
    %v784 = vadd.f32 %v479, %v783
    %v785 = vpop.f32.mrb[0].mxu0
    %786 = vmatprep.mubr.f32.mxu0 0.0
    %787 = vmatmul.mubr.f32.gmra.mrb[0].mxu0 %v153
    %v788 = vpop.f32.mrb[0].mxu0
    %v789 = vadd.f32 %v484, %v788
    %v790 = vpop.f32.mrb[0].mxu0
    %791 = vmatprep.mubr.f32.mxu0 0.0
    %792 = vmatmul.mubr.f32.gmra.mrb[0].mxu0 %v156
    %v793 = vpop.f32.mrb[0].mxu0
    %v794 = vadd.f32 %v489, %v793
    %v795 = vpop.f32.mrb[0].mxu0
    %796 = vmatprep.mubr.f32.mxu0 0.0
    %797 = vmatmul.mubr.f32.gmra.mrb[0].mxu0 %v159
    %v798 = vpop.f32.mrb[0].mxu0
    %v799 = vadd.f32 %v494, %v798
    %v800 = vpop.f32.mrb[0].mxu0
    %801 = vmatprep.mubr.f32.mxu0 0.0
    %802 = vmatmul.mubr.f32.gmra.mrb[0].mxu0 %v162
    %v803 = vpop.f32.mrb[0].mxu0
    %v804 = vadd.f32 %v499, %v803
    %v805 = vpop.f32.mrb[0].mxu0
    %806 = vmatprep.mubr.f32.mxu0 0.0
    %807 = vmatmul.mubr.f32.gmra.mrb[0].mxu0 %v165
    %v808 = vpop.f32.mrb[0].mxu0
    %v809 = vadd.f32 %v504, %v808
    %v810 = vpop.f32.mrb[0].mxu0
    %811 = vmatprep.mubr.f32.mxu0 0.0
    %812 = vmatmul.mubr.f32.gmra.mrb[0].mxu0 %v168
    %v813 = vpop.f32.mrb[0].mxu0
    %v814 = vadd.f32 %v509, %v813
    %v815 = vpop.f32.mrb[0].mxu0
    %816 = vmatprep.mubr.f32.mxu0 0.0
    %817 = vmatmul.mubr.f32.gmra.mrb[0].mxu0 %v171
    %v818 = vpop.f32.mrb[0].mxu0
    %v819 = vadd.f32 %v514, %v818
    %v820 = vpop.f32.mrb[0].mxu0
    %821 = vmatprep.mubr.f32.mxu0 0.0
    %822 = vmatmul.mubr.f32.gmra.mrb[0].mxu0 %v174
    %v823 = vpop.f32.mrb[0].mxu0
    %v824 = vadd.f32 %v519, %v823
    %v825 = vpop.f32.mrb[0].mxu0
    %826 = vmatprep.mubr.f32.mxu0 0.0
    %827 = vmatmul.mubr.f32.gmra.mrb[0].mxu0 %v177
    %v828 = vpop.f32.mrb[0].mxu0
    %v829 = vadd.f32 %v524, %v828
    %v830 = vpop.f32.mrb[0].mxu0
    %831 = vmatprep.mubr.f32.mxu0 0.0
    %832 = vmatmul.mubr.f32.gmra.mrb[0].mxu0 %v180
    %v833 = vpop.f32.mrb[0].mxu0
    %v834 = vadd.f32 %v529, %v833
    %v835 = vpop.f32.mrb[0].mxu0
    %836 = vmatprep.mubr.f32.mxu0 0.0
    %837 = vmatmul.mubr.f32.gmra.mrb[0].mxu0 %v183
    %v838 = vpop.f32.mrb[0].mxu0
    %v839 = vadd.f32 %v534, %v838
    %v840 = vpop.f32.mrb[0].mxu0
    %841 = vdwg.mxu0
    %842 = vst [vmem:[#allocation7] sm:$0xff] %v604
    %843 = vst [vmem:[#allocation7 + $0x8] sm:$0xff] %v609
    %844 = vst [vmem:[#allocation7 + $0x10] sm:$0xff] %v614
    %845 = vst [vmem:[#allocation7 + $0x18] sm:$0xff] %v619
    %846 = vst [vmem:[#allocation7 + $0x20] sm:$0xff] %v624
    %847 = vst [vmem:[#allocation7 + $0x28] sm:$0xff] %v629
    %848 = vst [vmem:[#allocation7 + $0x30] sm:$0xff] %v634
    %849 = vst [vmem:[#allocation7 + $0x38] sm:$0xff] %v639
    %850 = vst [vmem:[#allocation7 + $0x40] sm:$0xff] %v644
    %851 = vst [vmem:[#allocation7 + $0x48] sm:$0xff] %v649
    %852 = vst [vmem:[#allocation7 + $0x50] sm:$0xff] %v654
    %853 = vst [vmem:[#allocation7 + $0x58] sm:$0xff] %v659
    %854 = vst [vmem:[#allocation7 + $0x60] sm:$0xff] %v664
    %855 = vst [vmem:[#allocation7 + $0x68] sm:$0xff] %v669
    %856 = vst [vmem:[#allocation7 + $0x70] sm:$0xff] %v674
    %857 = vst [vmem:[#allocation7 + $0x78] sm:$0xff] %v679
    %858 = vst [vmem:[#allocation7 + $0x80] sm:$0xff] %v684
    %859 = vst [vmem:[#allocation7 + $0x88] sm:$0xff] %v689
    %860 = vst [vmem:[#allocation7 + $0x90] sm:$0xff] %v694
    %861 = vst [vmem:[#allocation7 + $0x98] sm:$0xff] %v699
    %862 = vst [vmem:[#allocation7 + $0xa0] sm:$0xff] %v704
    %863 = vst [vmem:[#allocation7 + $0xa8] sm:$0xff] %v709
    %864 = vst [vmem:[#allocation7 + $0xb0] sm:$0xff] %v714
    %865 = vst [vmem:[#allocation7 + $0xb8] sm:$0xff] %v719
    %866 = vst [vmem:[#allocation7 + $0xc0] sm:$0xff] %v724
    %867 = vst [vmem:[#allocation7 + $0xc8] sm:$0xff] %v729
    %868 = vst [vmem:[#allocation7 + $0xd0] sm:$0xff] %v734
    %869 = vst [vmem:[#allocation7 + $0xd8] sm:$0xff] %v739
    %870 = vst [vmem:[#allocation7 + $0xe0] sm:$0xff] %v744
    %871 = vst [vmem:[#allocation7 + $0xe8] sm:$0xff] %v749
    %872 = vst [vmem:[#allocation7 + $0xf0] sm:$0xff] %v754
    %873 = vst [vmem:[#allocation7 + $0xf8] sm:$0xff] %v759
    %874 = vst [vmem:[#allocation7 + $0x100] sm:$0xff] %v764
    %875 = vst [vmem:[#allocation7 + $0x108] sm:$0xff] %v769
    %876 = vst [vmem:[#allocation7 + $0x110] sm:$0xff] %v774
    %877 = vst [vmem:[#allocation7 + $0x118] sm:$0xff] %v779
    %878 = vst [vmem:[#allocation7 + $0x120] sm:$0xff] %v784
    %879 = vst [vmem:[#allocation7 + $0x128] sm:$0xff] %v789
    %880 = vst [vmem:[#allocation7 + $0x130] sm:$0xff] %v794
    %881 = vst [vmem:[#allocation7 + $0x138] sm:$0xff] %v799
    %882 = vst [vmem:[#allocation7 + $0x140] sm:$0xff] %v804
    %883 = vst [vmem:[#allocation7 + $0x148] sm:$0xff] %v809
    %884 = vst [vmem:[#allocation7 + $0x150] sm:$0xff] %v814
    %885 = vst [vmem:[#allocation7 + $0x158] sm:$0xff] %v819
    %886 = vst [vmem:[#allocation7 + $0x160] sm:$0xff] %v824
    %887 = vst [vmem:[#allocation7 + $0x168] sm:$0xff] %v829
    %888 = vst [vmem:[#allocation7 + $0x170] sm:$0xff] %v834
    %889 = vst [vmem:[#allocation7 + $0x178] sm:$0xff] %v839
    // Predicated region
    $region18: #{tpu_custom_call.1} parent=1 // pred_check
      _
    $region19: #{tpu_custom_call.1} parent=1 // pred_check_branch
      %891 = sbr.rel (0) target = $region21
    $region20: #{tpu_custom_call.1} parent=1 // pred_region
      %s893 = ssub.s32 6144, 6144
      %894 = vsyncadd [#allocation4], %s893
      %s895 = sshll.u32 [#allocation7], 4
      %s896 = int_to_ptr.vmem [resolvable:$true] %s895
      %901 = dma.vmem_to_hbm [thread:$0]  %s896, 6144, %s2, [#allocation4], 128, 128, 8
    $region21: #{tpu_custom_call.1} parent=1 // pred_fallthru
      _
    // Predicated region
    $region22: #{tpu_custom_call.1} parent=1 // pred_check
      _
    $region23: #{tpu_custom_call.1} parent=1 // pred_check_branch
      %903 = sbr.rel (0) target = $region25
    $region24: #{tpu_custom_call.1} parent=1 // pred_region
      %904 = dma.done [#allocation4], 6144
    $region25: #{tpu_custom_call.1} parent=1 // pred_fallthru
      _
    %905 = vsyncpa [#allocation3], 1
    %906 = vsyncpa [#allocation6], 1
    %907 = vsyncpa [#allocation4], 1

</llo_original>
